<compile_context>
chip_gen: v5e
topology: v5e:2x2
jax: 0.10.0
libtpu: 0.0.40
codegen_flags: <defaults>
</compile_context>

<pallas_src>
import jax
import jax.numpy as jnp
from jax.experimental import pallas as pl
from jax.experimental.pallas import tpu as pltpu


def _round_up(x, m):
    return (x + m - 1) // m * m


def _pick_tile(dim_padded, prefer_two_tiles=False):
    """Largest of (512, 256, 128) dividing dim_padded (dim_padded % 128 == 0)."""
    tile = 128
    for cand in (512, 256, 128):
        if dim_padded % cand == 0:
            tile = cand
            break
    # Keep >=2 tiles on a parallel axis when we can (v7x megacore).
    if (prefer_two_tiles and dim_padded // tile < 2 and dim_padded >= 256
            and (dim_padded // 2) % 128 == 0):
        tile = dim_padded // 2
    return tile


# --------------------------------------------------------------------------
# Pallas kernel: out = relu(x @ w + bias), accumulated directly in o_ref
# --------------------------------------------------------------------------
def _fc_bn_relu_kernel(x_ref, w_ref, b_ref, o_ref):
    k = pl.program_id(2)

    @pl.when(k == 0)
    def _():
        o_ref[...] = jnp.zeros_like(o_ref)

    # bf16 MXU inputs, f32 accumulation (weights are already bf16 in HBM).
    o_ref[...] += jnp.dot(
        x_ref[...].astype(jnp.bfloat16),
        w_ref[...],
        preferred_element_type=jnp.float32,
    )

    @pl.when(k == pl.num_programs(2) - 1)
    def _():
        # f32 epilogue: bias add + ReLU (BN already folded into w/bias).
        o_ref[...] = jnp.maximum(o_ref[...] + b_ref[...], 0.0)


def fused_linear_bn_relu(x, w, bias):
    """relu(x @ w + bias).  x: [M, K] f32, w: [K, N] bf16, bias: [N] f32."""
    M, K = x.shape
    Kw, N = w.shape
    assert K == Kw, (K, Kw)

    Kp = _round_up(K, 128)
    Np = _round_up(N, 128)
    if M > 256:
        tm = 256
        Mp = _round_up(M, tm)
    else:
        tm = _round_up(M, 8)
        Mp = tm
    tk = _pick_tile(Kp)
    tn = _pick_tile(Np, prefer_two_tiles=True)

    # Pad only when the real dims are not already aligned (no-op for aligned
    # shapes -> no extra HBM round trips).
    if (Mp, Kp) != (M, K):
        x = jnp.pad(x, ((0, Mp - M), (0, Kp - K)))
    if (Kp, Np) != (K, N):
        w = jnp.pad(w, ((0, Kp - K), (0, Np - N)))
    b2 = (jnp.pad(bias, (0, Np - N)) if Np != N else bias).reshape(1, Np)

    out = pl.pallas_call(
        _fc_bn_relu_kernel,
        out_shape=jax.ShapeDtypeStruct((Mp, Np), jnp.float32),
        grid_spec=pltpu.PrefetchScalarGridSpec(
            num_scalar_prefetch=0,
            grid=(Mp // tm, Np // tn, Kp // tk),
            in_specs=[
                pl.BlockSpec((tm, tk), lambda i, j, k: (i, k)),
                pl.BlockSpec((tk, tn), lambda i, j, k: (k, j)),
                pl.BlockSpec((1, tn), lambda i, j, k: (0, j)),
            ],
            out_specs=pl.BlockSpec((tm, tn), lambda i, j, k: (i, j)),
        ),
        compiler_params=pltpu.CompilerParams(
            dimension_semantics=("parallel", "parallel", "arbitrary")),
    )(x, w, b2)

    if (Mp, Np) != (M, N):
        out = out[:M, :N]
    return out


# --------------------------------------------------------------------------
# Baseline_Block forward (dropout = identity at inference)
# --------------------------------------------------------------------------
def baseline_block_forward(x, w_folded, bias_folded):
    y = fused_linear_bn_relu(x, w_folded, bias_folded)
    # Dropout(p=0.2): identity in eval mode.
    return y


# --------------------------------------------------------------------------
# Parameters (deterministic, synthetic) and BN folding (one-time, off hot path)
# --------------------------------------------------------------------------
def init_params(key, ch_in, ch_out):
    k1, k2, k3, k4, k5, k6 = jax.random.split(key, 6)
    w = jax.random.normal(k1, (ch_out, ch_in), jnp.float32) / jnp.sqrt(ch_in)
    b = 0.01 * jax.random.normal(k2, (ch_out,), jnp.float32)
    gamma = 1.0 + 0.1 * jax.random.normal(k3, (ch_out,), jnp.float32)
    beta = 0.1 * jax.random.normal(k4, (ch_out,), jnp.float32)
    mean = 0.1 * jax.random.normal(k5, (ch_out,), jnp.float32)
    var = 1.0 + 0.1 * jax.random.uniform(k6, (ch_out,), jnp.float32)
    return (w, b, gamma, beta, mean, var)


def fold_params(params, eps=1e-5):
    """Fold eval-mode BN into the linear layer; returns w_folded [in,out] f32, bias [out]."""
    w, b, gamma, beta, mean, var = params
    s = gamma / jnp.sqrt(var + eps)
    w_folded = w.T * s[None, :]          # [ch_in, ch_out], pre-transposed
    bias_folded = (b - mean) * s + beta
    return w_folded, bias_folded


if __name__ == "__main__":
    batch, ch_in, ch_out = 16, 128, 256
    key = jax.random.PRNGKey(0)
    kx, kp = jax.random.split(key)
    x = jax.random.normal(kx, (batch, ch_in), jnp.float32)

    params = init_params(kp, ch_in, ch_out)
    w_f32, bias = fold_params(params)              # one-time prep
    w_bf16 = w_f32.astype(jnp.bfloat16)            # weights cast once, off hot path

    fwd = jax.jit(baseline_block_forward)
    out = fwd(x, w_bf16, bias)
    jax.block_until_ready(out)

    # Pure-JAX reference (f32) — tolerance sized for the bf16 MXU dot.
    ref = jnp.maximum(x @ w_f32 + bias[None, :], 0.0)

    assert out.shape == (batch, ch_out), out.shape
    assert bool(jnp.all(jnp.isfinite(out)))
    max_err = float(jnp.max(jnp.abs(out - ref)))
    assert max_err < 5e-2, f"max abs err {max_err}"
    print("KERNEL_OK")
</pallas_src>

<mosaic_0001>
module attributes {stable_mosaic.version = 11 : i64} {
  func.func @_fc_bn_relu_kernel(%arg0: i32, %arg1: i32, %arg2: i32, %arg3: memref<16x128xf32, #tpu.memory_space<vmem>>, %arg4: memref<128x128xbf16, #tpu.memory_space<vmem>>, %arg5: memref<1x128xf32, #tpu.memory_space<vmem>>, %arg6: memref<16x128xf32, #tpu.memory_space<vmem>>) attributes {dimension_semantics = [#tpu.dimension_semantics<parallel>, #tpu.dimension_semantics<parallel>, #tpu.dimension_semantics<arbitrary>], iteration_bounds = array<i64: 1, 2, 1>, scalar_prefetch = 0 : i64, scratch_operands = 0 : i64, tpu.core_type = #tpu.core_type<tc>, window_params = [{transform_indices = @transform_0, window_bounds = array<i64: 16, 128>}, {transform_indices = @transform_1, window_bounds = array<i64: 128, 128>}, {transform_indices = @transform_2, window_bounds = array<i64: 1, 128>}, {transform_indices = @transform_3, window_bounds = array<i64: 16, 128>}]} {
    %c0_i32 = arith.constant 0 : i32
    %0 = arith.cmpi eq, %arg2, %c0_i32 : i32
    %1 = arith.extui %0 : i1 to i32
    %c0_i32_0 = arith.constant 0 : i32
    %2 = arith.cmpi ne, %1, %c0_i32_0 : i32
    scf.if %2 {
      %cst_10 = arith.constant 0.000000e+00 : f32
      %13 = vector.broadcast %cst_10 : f32 to vector<16x128xf32>
      %c0_11 = arith.constant 0 : index
      %c0_12 = arith.constant 0 : index
      %14 = vector.load %arg6[%c0_11, %c0_12] : memref<16x128xf32, #tpu.memory_space<vmem>>, vector<16x128xf32>
      tpu.vector_store %arg6[%c0_11, %c0_12], %13 {strides = array<i32>} : memref<16x128xf32, #tpu.memory_space<vmem>>, vector<16x128xf32>,
    } else {
    }
    %c0 = arith.constant 0 : index
    %c0_1 = arith.constant 0 : index
    %3 = vector.load %arg6[%c0, %c0_1] : memref<16x128xf32, #tpu.memory_space<vmem>>, vector<16x128xf32>
    %c0_2 = arith.constant 0 : index
    %c0_3 = arith.constant 0 : index
    %4 = vector.load %arg3[%c0_2, %c0_3] : memref<16x128xf32, #tpu.memory_space<vmem>>, vector<16x128xf32>
    %5 = arith.truncf %4 : vector<16x128xf32> to vector<16x128xbf16>
    %c0_4 = arith.constant 0 : index
    %c0_5 = arith.constant 0 : index
    %6 = vector.load %arg4[%c0_4, %c0_5] : memref<128x128xbf16, #tpu.memory_space<vmem>>, vector<128x128xbf16>
    %cst = arith.constant dense<0.000000e+00> : vector<16x128xf32>
    %7 = tpu.matmul %5, %6, %cst {dimension_numbers = #tpu.dot_dimension_numbers<[1], [0], [0], [1], [0, 0, 1, 1], [], []>} : vector<16x128xbf16>, vector<128x128xbf16>, vector<16x128xf32> -> vector<16x128xf32>
    %8 = arith.addf %3, %7 : vector<16x128xf32>
    %c0_6 = arith.constant 0 : index
    %c0_7 = arith.constant 0 : index
    %9 = vector.load %arg6[%c0_6, %c0_7] : memref<16x128xf32, #tpu.memory_space<vmem>>, vector<16x128xf32>
    tpu.vector_store %arg6[%c0_6, %c0_7], %8 {strides = array<i32>} : memref<16x128xf32, #tpu.memory_space<vmem>>, vector<16x128xf32>,
    %c0_i32_8 = arith.constant 0 : i32
    %10 = arith.cmpi eq, %arg2, %c0_i32_8 : i32
    %11 = arith.extui %10 : i1 to i32
    %c0_i32_9 = arith.constant 0 : i32
    %12 = arith.cmpi ne, %11, %c0_i32_9 : i32
    scf.if %12 {
      %c0_10 = arith.constant 0 : index
      %c0_11 = arith.constant 0 : index
      %13 = vector.load %arg6[%c0_10, %c0_11] : memref<16x128xf32, #tpu.memory_space<vmem>>, vector<16x128xf32>
      %c0_12 = arith.constant 0 : index
      %c0_13 = arith.constant 0 : index
      %14 = vector.load %arg5[%c0_12, %c0_13] : memref<1x128xf32, #tpu.memory_space<vmem>>, vector<1x128xf32>
      %15 = vector.broadcast %14 : vector<1x128xf32> to vector<16x128xf32>
      %16 = arith.addf %13, %15 : vector<16x128xf32>
      %cst_14 = arith.constant 0.000000e+00 : f32
      %17 = vector.broadcast %cst_14 : f32 to vector<16x128xf32>
      %18 = arith.maximumf %16, %17 : vector<16x128xf32>
      %c0_15 = arith.constant 0 : index
      %c0_16 = arith.constant 0 : index
      %19 = vector.load %arg6[%c0_15, %c0_16] : memref<16x128xf32, #tpu.memory_space<vmem>>, vector<16x128xf32>
      tpu.vector_store %arg6[%c0_15, %c0_16], %18 {strides = array<i32>} : memref<16x128xf32, #tpu.memory_space<vmem>>, vector<16x128xf32>,
    } else {
    }
    return
  }
  func.func @transform_0(%arg0: i32, %arg1: i32, %arg2: i32) -> (i32, i32) {
    %c0_i32 = arith.constant 0 : i32
    return %arg0, %arg2 : i32, i32
  }
  func.func @transform_1(%arg0: i32, %arg1: i32, %arg2: i32) -> (i32, i32) {
    %c0_i32 = arith.constant 0 : i32
    return %arg2, %arg1 : i32, i32
  }
  func.func @transform_2(%arg0: i32, %arg1: i32, %arg2: i32) -> (i32, i32) {
    %c0_i32 = arith.constant 0 : i32
    %c0_i32_0 = arith.constant 0 : i32
    return %c0_i32, %arg1 : i32, i32
  }
  func.func @transform_3(%arg0: i32, %arg1: i32, %arg2: i32) -> (i32, i32) {
    %c0_i32 = arith.constant 0 : i32
    return %arg0, %arg1 : i32, i32
  }
}

</mosaic_0001>

<llo_original>
// kernel: baseline_block_forward.1
$region0: #{baseline_block_forward.1}
  #allocation0 [shape = 'u32[]', space=smem, size = 0x4, offset = 0x4, fixed_abs, tag = 'smem constant byte address 0x4 - core index']
  #allocation1 [shape = 'u32[72,128]{1,0:T(1,128)}', space=vmem, size = 0x9000, scoped, tag = 'internal scratch']
  %s0 = inlined_call_operand.hbm [shape: f32[16,128], index: 0, kind: input, shape index: {}]
  %s1 = inlined_call_operand.hbm [shape: bf16[128,256], index: 1, kind: input, shape index: {}]
  %s2 = inlined_call_operand.vmem [shape: f32[1,256], index: 2, kind: input, shape index: {}]
  %s3 = inlined_call_operand.hbm [shape: f32[16,256], index: 3, kind: output, shape index: {}]
  %s4 = sld [smem:[#allocation0]]
  $region61: #{baseline_block_forward.1} parent=0
    _
  %s6 = ssub.s32 1, %s4
  %s7 = scalar_select 0, %s6, %s4
  $region1: #{baseline_block_forward.1} parent=0
    #allocation2 [shape = 'u8[8192]{0}', space=vmem, size = 0x2000, scoped, tag = 'input window, operand 0, single buffered']
    #allocation3 [shape = 's32[2]{0}', space=sflag, size = 0x8, scoped, tag = 'scoped memory for baseline_block_forward.1']
    #allocation4 [shape = 's32[2]{0}', space=sflag, size = 0x8, scoped, tag = 'scoped memory for baseline_block_forward.1']
    #allocation5 [shape = 'u8[65536]{0}', space=vmem, size = 0x10000, scoped, tag = 'input window, operand 1']
    #allocation6 [shape = 's32[2]{0}', space=sflag, size = 0x8, scoped, tag = 'scoped memory for baseline_block_forward.1']
    #allocation7 [shape = 'u8[16384]{0}', space=vmem, size = 0x4000, scoped, tag = 'output window, operand 0']
    %8 = vsyncpa [#allocation3], 0
    %9 = vsyncpa [#allocation6], 0
    %s10 = scalar_lea.sflag [#allocation6], 1
    %11 = vsyncpa %s10, 0
    %12 = vsyncpa [#allocation4], 0
    %s13 = scalar_lea.sflag [#allocation4], 1
    %14 = vsyncpa %s13, 0
    loop: start=0, step=1, limit=4
    $region2: #{baseline_block_forward.1} parent=1 // loop_pre_header
      _
    $region3: #{baseline_block_forward.1} parent=1 // loop_header
      %s16 = sphi 0, %s20
      %p17 = scmp.ge.s32.totalorder %s16, 4
      %s23 = sphi 0, %s42
      %s24 = sphi 0, %s38
      %s25 = sphi 0, %s34
      %s26 = sphi 0, %s23
      %s27 = sphi 0, %s24
      %s28 = sphi 0, %s25
      %s29 = sphi 0, %s26
      %s30 = sphi 0, %s27
      %s31 = sphi 0, %s28
      %s47 = sphi 0, %s49
      %s50 = sphi 0, %s47
      %s51 = sphi 0, %s50
      %s67 = sphi 0, %s51
      %s75 = sphi 0, %s77
      %s78 = sphi 0, %s75
      %s79 = sphi 0, %s78
      %s95 = sphi 0, %s79
      %s101 = sphi 0, %s103
      %s104 = sphi 0, %s101
      %s105 = sphi 0, %s104
      %s121 = sphi 0, %s105
      %s129 = sphi 0, %s131
      %s132 = sphi 0, %s129
      %s133 = sphi 0, %s132
      %s149 = sphi 0, %s133
    $region4: #{baseline_block_forward.1} parent=1 // loop_header_branch
      %19 = sbr.rel (%p17) target = $region8
    $region5: #{baseline_block_forward.1} parent=1 // loop_body
      %s21 = ssub.s32 %s16, 1
      %s22 = ssub.s32 %s16, 2
      %s32 = sadd.s32 1, %s25
      %p33 = scmp.ge.s32.totalorder %s32, 1
      %s34 = scalar_select %p33, 0, %s32
      %s35 = sadd.s32 1, %s24
      %s36 = scalar_select %p33, %s35, %s24
      %p37 = scmp.ge.s32.totalorder %s36, 2
      %s38 = scalar_select %p37, 0, %s36
      %s39 = sadd.s32 1, %s23
      %s40 = scalar_select %p37, %s39, %s23
      %p41 = scmp.ge.s32.totalorder %s40, 1
      %s42 = scalar_select %p41, 0, %s40
      %s43 = ssub.s32 %s23, %s42
      %s44 = ssub.s32 %s25, %s34
      %s45 = sor.u32 %s43, %s44
      %p46 = scmp.eq.s32.totalorder %s45, 0
      %s48 = sadd.s32 %s47, 1
      %s49 = scalar_select %p46, %s47, %s48
      %p52 = pneg %p46
      %p53 = scmp.eq.s32.totalorder %s16, 1
      %p54 = por %p52, %p53
      %p55 = scmp.ne.s32.totalorder %s47, %s50
      %p56 = scmp.eq.s32.totalorder %s16, 0
      %p57 = por %p55, %p56
      %p58 = scmp.ne.s32.totalorder %s47, %s50
      %p59 = scmp.eq.s32.totalorder %s21, 1
      %p60 = por %p58, %p59
      %p61 = scmp.ne.s32.totalorder %s50, %s51
      %p62 = scmp.eq.s32.totalorder %s21, 0
      %p63 = por %p61, %p62
      %p64 = scmp.ne.s32.totalorder %s50, %s51
      %p65 = scmp.eq.s32.totalorder %s22, 1
      %p66 = por %p64, %p65
      %p68 = scmp.ne.s32.totalorder %s51, %s67
      %p69 = scmp.eq.s32.totalorder %s22, 0
      %p70 = por %p68, %p69
      %s71 = ssub.s32 %s25, %s34
      %s72 = ssub.s32 %s24, %s38
      %s73 = sor.u32 %s71, %s72
      %p74 = scmp.eq.s32.totalorder %s73, 0
      %s76 = sadd.s32 %s75, 1
      %s77 = scalar_select %p74, %s75, %s76
      %p80 = pneg %p74
      %p81 = scmp.eq.s32.totalorder %s16, 1
      %p82 = por %p80, %p81
      %p83 = scmp.ne.s32.totalorder %s75, %s78
      %p84 = scmp.eq.s32.totalorder %s16, 0
      %p85 = por %p83, %p84
      %p86 = scmp.ne.s32.totalorder %s75, %s78
      %p87 = scmp.eq.s32.totalorder %s21, 1
      %p88 = por %p86, %p87
      %p89 = scmp.ne.s32.totalorder %s78, %s79
      %p90 = scmp.eq.s32.totalorder %s21, 0
      %p91 = por %p89, %p90
      %p92 = scmp.ne.s32.totalorder %s78, %s79
      %p93 = scmp.eq.s32.totalorder %s22, 1
      %p94 = por %p92, %p93
      %p96 = scmp.ne.s32.totalorder %s79, %s95
      %p97 = scmp.eq.s32.totalorder %s22, 0
      %p98 = por %p96, %p97
      %s99 = ssub.s32 %s24, %s38
      %p100 = scmp.eq.s32.totalorder %s99, 0
      %s102 = sadd.s32 %s101, 1
      %s103 = scalar_select %p100, %s101, %s102
      %p106 = pneg %p100
      %p107 = scmp.eq.s32.totalorder %s16, 1
      %p108 = por %p106, %p107
      %p109 = scmp.ne.s32.totalorder %s101, %s104
      %p110 = scmp.eq.s32.totalorder %s16, 0
      %p111 = por %p109, %p110
      %p112 = scmp.ne.s32.totalorder %s101, %s104
      %p113 = scmp.eq.s32.totalorder %s21, 1
      %p114 = por %p112, %p113
      %p115 = scmp.ne.s32.totalorder %s104, %s105
      %p116 = scmp.eq.s32.totalorder %s21, 0
      %p117 = por %p115, %p116
      %p118 = scmp.ne.s32.totalorder %s104, %s105
      %p119 = scmp.eq.s32.totalorder %s22, 1
      %p120 = por %p118, %p119
      %p122 = scmp.ne.s32.totalorder %s105, %s121
      %p123 = scmp.eq.s32.totalorder %s22, 0
      %p124 = por %p122, %p123
      %s125 = ssub.s32 %s23, %s42
      %s126 = ssub.s32 %s24, %s38
      %s127 = sor.u32 %s125, %s126
      %p128 = scmp.eq.s32.totalorder %s127, 0
      %s130 = sadd.s32 %s129, 1
      %s131 = scalar_select %p128, %s129, %s130
      %p134 = pneg %p128
      %p135 = scmp.eq.s32.totalorder %s16, 1
      %p136 = por %p134, %p135
      %p137 = scmp.ne.s32.totalorder %s129, %s132
      %p138 = scmp.eq.s32.totalorder %s16, 0
      %p139 = por %p137, %p138
      %p140 = scmp.ne.s32.totalorder %s129, %s132
      %p141 = scmp.eq.s32.totalorder %s21, 1
      %p142 = por %p140, %p141
      %p143 = scmp.ne.s32.totalorder %s132, %s133
      %p144 = scmp.eq.s32.totalorder %s21, 0
      %p145 = por %p143, %p144
      %p146 = scmp.ne.s32.totalorder %s132, %s133
      %p147 = scmp.eq.s32.totalorder %s22, 1
      %p148 = por %p146, %p147
      %p150 = scmp.ne.s32.totalorder %s133, %s149
      %p151 = scmp.eq.s32.totalorder %s22, 0
      %p152 = por %p150, %p151
      %p153 = scmp.le.s32.totalorder 1, %s16
      %p154 = scmp.lt.s32.totalorder %s16, 3
      %p155 = pnand %p153, %p154
      %p156 = pneg %p155
      // Predicated region
      $region9: #{baseline_block_forward.1} parent=5 // pred_check
        _
      $region10: #{baseline_block_forward.1} parent=5 // pred_check_branch
        %158 = sbr.rel (%p155) target = $region12
      $region11: #{baseline_block_forward.1} parent=5 // pred_region
        %s159 = ssub.s32 %s16, 1
        // Predicated region
        $region13: #{baseline_block_forward.1} parent=11 // pred_check
          %p160 = pneg %p63
        $region14: #{baseline_block_forward.1} parent=11 // pred_check_branch
          %162 = sbr.rel (%p160) target = $region16
        $region15: #{baseline_block_forward.1} parent=11 // pred_region
          %s163 = smul.u32 2, %s26
          %165 = vsyncadd [#allocation3], 0
          %s166 = sadd.s32 %s28, %s163
          %s167 = smul.addr %s166, 8
          %s168 = scalar_lea.hbm %s0, %s167
          %s169 = sshll.u32 %s168, 4
          %s170 = int_to_ptr.hbm [resolvable:$true] %s169
          %s171 = sshll.u32 [#allocation2], 4
          %s172 = int_to_ptr.vmem [resolvable:$true] %s171
          %177 = dma.hbm_to_vmem [thread:$0]  %s170, 256, %s172, [#allocation3], 128, 128, 8
        $region16: #{baseline_block_forward.1} parent=11 // pred_fallthru
          _
      $region12: #{baseline_block_forward.1} parent=5 // pred_fallthru
        _
      %p178 = scmp.lt.s32.totalorder %s16, 2
      // Predicated region
      $region17: #{baseline_block_forward.1} parent=5 // pred_check
        %p179 = pneg %p178
      $region18: #{baseline_block_forward.1} parent=5 // pred_check_branch
        %181 = sbr.rel (%p179) target = $region20
      $region19: #{baseline_block_forward.1} parent=5 // pred_region
        // Predicated region
        $region21: #{baseline_block_forward.1} parent=19 // pred_check
          %p182 = pneg %p85
        $region22: #{baseline_block_forward.1} parent=19 // pred_check_branch
          %184 = sbr.rel (%p182) target = $region24
        $region23: #{baseline_block_forward.1} parent=19 // pred_region
          %s185 = sand.u32 %s75, 1
          %s186 = scalar_lea.sflag [#allocation6], %s185
          %s187 = sand.u32 %s75, 1
          %s188 = smul.addr %s187, 64
          %s189 = scalar_lea.vmem [#allocation5], %s188
          %s190 = smul.u32 16, %s25
          %192 = vsyncadd %s186, 0
          %s193 = smul.addr %s190, 2
          %s194 = sadd.s32 %s24, %s193
          %s195 = smul.addr %s194, 4
          %s196 = scalar_lea.hbm %s1, %s195
          %s197 = sshll.u32 %s196, 4
          %s198 = int_to_ptr.hbm [resolvable:$true] %s197
          %s199 = sshll.u32 %s189, 4
          %s200 = int_to_ptr.vmem [resolvable:$true] %s199
          %205 = dma.hbm_to_vmem [thread:$0]  %s198, 1024, %s200, %s186, 128, 64, 4
        $region24: #{baseline_block_forward.1} parent=19 // pred_fallthru
          _
        // Predicated region
        $region25: #{baseline_block_forward.1} parent=19 // pred_check
          %p206 = pneg %p111
        $region26: #{baseline_block_forward.1} parent=19 // pred_check_branch
          %208 = sbr.rel (%p206) target = $region28
        $region27: #{baseline_block_forward.1} parent=19 // pred_region
          %p209 = scmp.lt.s32.totalorder %s24, 1
          %s210 = scalar_select %p209, %s24, 1
          %s211 = scalar_lea.vmem %s2, %s210
        $region28: #{baseline_block_forward.1} parent=19 // pred_fallthru
          _
      $region20: #{baseline_block_forward.1} parent=5 // pred_fallthru
        _
      %p212 = scmp.le.s32.totalorder 1, %s16
      %p213 = scmp.lt.s32.totalorder %s16, 3
      %p214 = pnand %p212, %p213
      %p215 = pneg %p214
      // Predicated region
      $region29: #{baseline_block_forward.1} parent=5 // pred_check
        _
      $region30: #{baseline_block_forward.1} parent=5 // pred_check_branch
        %217 = sbr.rel (%p214) target = $region32
      $region31: #{baseline_block_forward.1} parent=5 // pred_region
        %s218 = ssub.s32 %s16, 1
        // Predicated region
        $region33: #{baseline_block_forward.1} parent=31 // pred_check
          %p219 = pneg %p63
        $region34: #{baseline_block_forward.1} parent=31 // pred_check_branch
          %221 = sbr.rel (%p219) target = $region36
        $region35: #{baseline_block_forward.1} parent=31 // pred_region
          %223 = dma.done [#allocation3], 256
        $region36: #{baseline_block_forward.1} parent=31 // pred_fallthru
          _
        %s224 = sand.u32 %s78, 1
        %s225 = scalar_lea.sflag [#allocation6], %s224
        %s226 = sand.u32 %s78, 1
        %s227 = smul.addr %s226, 64
        %s228 = scalar_lea.vmem [#allocation5], %s227
        // Predicated region
        $region37: #{baseline_block_forward.1} parent=31 // pred_check
          %p229 = pneg %p91
        $region38: #{baseline_block_forward.1} parent=31 // pred_check_branch
          %231 = sbr.rel (%p229) target = $region40
        $region39: #{baseline_block_forward.1} parent=31 // pred_region
          %233 = dma.done %s225, 1024
        $region40: #{baseline_block_forward.1} parent=31 // pred_fallthru
          _
        %p234 = pneg %p63
        %p235 = pneg %p60
        %s236 = sand.u32 %s78, 1
        %s237 = scalar_lea.sflag [#allocation6], %s236
        %s238 = sand.u32 %s78, 1
        %s239 = smul.addr %s238, 64
        %s240 = scalar_lea.vmem [#allocation5], %s239
        %p241 = pneg %p91
        %p242 = pneg %p88
        %p243 = scmp.lt.s32.totalorder %s27, 1
        %s244 = scalar_select %p243, %s27, 1
        %s245 = scalar_lea.vmem %s2, %s244
        %p246 = pneg %p117
        %p247 = pneg %p114
        %p248 = pneg %p145
        %p249 = pneg %p142
        %s250 = sand.u32 %s132, 1
        %s251 = scalar_lea.sflag [#allocation4], %s250
        %s252 = sand.u32 %s132, 1
        %s253 = smul.addr %s252, 16
        %s254 = scalar_lea.vmem [#allocation7], %s253
        %s255 = smul.u32 2, %s26
        %s256 = smul.u32 16, %s28
        %p257 = scmp.lt.s32.totalorder %s27, 1
        %s258 = scalar_select %p257, %s27, 1
        %s259 = scalar_lea.vmem %s2, %s258
        %s260 = smul.u32 2, %s26
        %p261 = scmp.eq.s32.totalorder %s28, 0
        // Predicated region
        $region41: #{baseline_block_forward.1} parent=31 // pred_check
          %p262 = pneg %p261
        $region42: #{baseline_block_forward.1} parent=31 // pred_check_branch
          %264 = sbr.rel (%p262) target = $region44
        $region43: #{baseline_block_forward.1} parent=31 // pred_region
          %265 = vst [vmem:[%s254] sm:$0xff] 0.0
          %266 = vst [vmem:[%s254 + $0x8] sm:$0xff] 0.0
        $region44: #{baseline_block_forward.1} parent=31 // pred_fallthru
          _
        %v267 = vld [vmem:[%s254] sm:$0xff]
        %v268 = vld [vmem:[%s254 + $0x8] sm:$0xff]
        %v269 = vld [vmem:[#allocation2] sm:$0xff]
        %v270 = vld [vmem:[#allocation2 + $0x8] sm:$0xff]
        %v271 = vpack.c.bf16 %v270, %v269
        %v272 = vld [vmem:[%s228] sm:$0xf]
        %v273 = vld [vmem:[%s228 + $0x4] sm:$0xf]
        %v274 = vld [vmem:[%s228 + $0x8] sm:$0xf]
        %v275 = vld [vmem:[%s228 + $0xc] sm:$0xf]
        %v276 = vld [vmem:[%s228 + $0x10] sm:$0xf]
        %v277 = vld [vmem:[%s228 + $0x14] sm:$0xf]
        %v278 = vld [vmem:[%s228 + $0x18] sm:$0xf]
        %v279 = vld [vmem:[%s228 + $0x1c] sm:$0xf]
        %v280 = vld [vmem:[%s228 + $0x20] sm:$0xf]
        %v281 = vld [vmem:[%s228 + $0x24] sm:$0xf]
        %v282 = vld [vmem:[%s228 + $0x28] sm:$0xf]
        %v283 = vld [vmem:[%s228 + $0x2c] sm:$0xf]
        %v284 = vld [vmem:[%s228 + $0x30] sm:$0xf]
        %v285 = vld [vmem:[%s228 + $0x34] sm:$0xf]
        %v286 = vld [vmem:[%s228 + $0x38] sm:$0xf]
        %v287 = vld [vmem:[%s228 + $0x3c] sm:$0xf]
        %v304 = vunpack.c.l.b16 %v272
        %v305 = vunpack.c.l.b16 %v273
        %v306 = vunpack.c.l.b16 %v274
        %v307 = vunpack.c.l.b16 %v275
        %v308 = vunpack.c.l.b16 %v276
        %v309 = vunpack.c.l.b16 %v277
        %v310 = vunpack.c.l.b16 %v278
        %v311 = vunpack.c.l.b16 %v279
        %v312 = vunpack.c.l.b16 %v280
        %v313 = vunpack.c.l.b16 %v281
        %v314 = vunpack.c.l.b16 %v282
        %v315 = vunpack.c.l.b16 %v283
        %v316 = vunpack.c.l.b16 %v284
        %v317 = vunpack.c.l.b16 %v285
        %v318 = vunpack.c.l.b16 %v286
        %v319 = vunpack.c.l.b16 %v287
        %v320 = vpack.c.b16 %v305, %v304
        %v321 = vpack.c.b16 %v307, %v306
        %v322 = vpack.c.b16 %v309, %v308
        %v323 = vpack.c.b16 %v311, %v310
        %v324 = vpack.c.b16 %v313, %v312
        %v325 = vpack.c.b16 %v315, %v314
        %v326 = vpack.c.b16 %v317, %v316
        %v327 = vpack.c.b16 %v319, %v318
        %336 = vmatpush.bf16.msra.mxu0 %v327
        %337 = vmatpush.bf16.msra.mxu0 %v326
        %338 = vmatpush.bf16.msra.mxu0 %v325
        %339 = vmatpush.bf16.msra.mxu0 %v324
        %340 = vmatpush.bf16.msra.mxu0 %v323
        %341 = vmatpush.bf16.msra.mxu0 %v322
        %342 = vmatpush.bf16.msra.mxu0 %v321
        %343 = vmatpush.bf16.msra.mxu0 %v320
        %344 = vmatmul.bf16.gmra.mxu0 %v271
        %v345 = vpop.f32.mrf.mxu0
        %v346 = vadd.f32 0.0, %v345
        %v347 = vpop.f32.mrf.mxu0
        %v348 = vadd.f32 0.0, %v347
        %349 = vdwg.mxu0
        %v350 = vadd.f32 %v267, %v346
        %v351 = vadd.f32 %v268, %v348
        %352 = vst [vmem:[%s254] sm:$0xff] %v350
        %353 = vst [vmem:[%s254 + $0x8] sm:$0xff] %v351
        // Predicated region
        $region45: #{baseline_block_forward.1} parent=31 // pred_check
          %p354 = pneg %p261
        $region46: #{baseline_block_forward.1} parent=31 // pred_check_branch
          %356 = sbr.rel (%p354) target = $region48
        $region47: #{baseline_block_forward.1} parent=31 // pred_region
          %v357 = vld [vmem:[%s254] sm:$0xff]
          %v358 = vld [vmem:[%s254 + $0x8] sm:$0xff]
          %v359 = vld [vmem:[%s259] sm:$0x1]
          %v361 = vperm.slane %v359, 0
          %v363 = vadd.f32 %v357, %v361
          %v364 = vadd.f32 %v358, %v361
          %v365 = vmax.f32 %v363, 0.0
          %v366 = vmax.f32 %v364, 0.0
          %367 = vst [vmem:[%s254] sm:$0xff] %v365
          %368 = vst [vmem:[%s254 + $0x8] sm:$0xff] %v366
        $region48: #{baseline_block_forward.1} parent=31 // pred_fallthru
          _
        %s369 = sand.u32 %s132, 1
        %s370 = scalar_lea.sflag [#allocation4], %s369
        %s371 = sand.u32 %s132, 1
        %s372 = smul.addr %s371, 16
        %s373 = scalar_lea.vmem [#allocation7], %s372
        // Predicated region
        $region49: #{baseline_block_forward.1} parent=31 // pred_check
          %p374 = pneg %p142
        $region50: #{baseline_block_forward.1} parent=31 // pred_check_branch
          %376 = sbr.rel (%p374) target = $region52
        $region51: #{baseline_block_forward.1} parent=31 // pred_region
          %s377 = smul.u32 2, %s26
          %379 = vsyncadd %s370, 0
          %s380 = smul.addr %s377, 2
          %s381 = sadd.s32 %s27, %s380
          %s382 = smul.addr %s381, 8
          %s383 = scalar_lea.hbm %s3, %s382
          %s384 = sshll.u32 %s373, 4
          %s385 = int_to_ptr.vmem [resolvable:$true] %s384
          %s386 = sshll.u32 %s383, 4
          %s387 = int_to_ptr.hbm [resolvable:$true] %s386
          %392 = dma.vmem_to_hbm [thread:$0]  %s385, 256, %s387, %s370, 128, 256, 8
        $region52: #{baseline_block_forward.1} parent=31 // pred_fallthru
          _
      $region32: #{baseline_block_forward.1} parent=5 // pred_fallthru
        _
      %p393 = scmp.le.s32.totalorder 2, %s16
      // Predicated region
      $region53: #{baseline_block_forward.1} parent=5 // pred_check
        %p394 = pneg %p393
      $region54: #{baseline_block_forward.1} parent=5 // pred_check_branch
        %396 = sbr.rel (%p394) target = $region56
      $region55: #{baseline_block_forward.1} parent=5 // pred_region
        %s397 = ssub.s32 %s16, 2
        // Predicated region
        $region57: #{baseline_block_forward.1} parent=55 // pred_check
          %p398 = pneg %p148
        $region58: #{baseline_block_forward.1} parent=55 // pred_check_branch
          %400 = sbr.rel (%p398) target = $region60
        $region59: #{baseline_block_forward.1} parent=55 // pred_region
          %s401 = sand.u32 %s133, 1
          %s402 = scalar_lea.sflag [#allocation4], %s401
          %s403 = sand.u32 %s133, 1
          %s404 = smul.addr %s403, 16
          %s405 = scalar_lea.vmem [#allocation7], %s404
          %407 = dma.done %s402, 256
        $region60: #{baseline_block_forward.1} parent=55 // pred_fallthru
          _
      $region56: #{baseline_block_forward.1} parent=5 // pred_fallthru
        _
    $region6: #{baseline_block_forward.1} parent=1 // loop_footer
      %s20 = sadd.s32 1, %s16
    $region7: #{baseline_block_forward.1} parent=1 // loop_footer_branch
      %15 = sbr.rel target = $region3
    $region8: #{baseline_block_forward.1} parent=1 // loop_exit
      _
    %408 = vsyncpa [#allocation3], 1
    %s409 = scalar_lea.sflag [#allocation3], 1
    %410 = vsyncpa %s409, 1
    %411 = vsyncpa [#allocation6], 1
    %s412 = scalar_lea.sflag [#allocation6], 1
    %413 = vsyncpa %s412, 1
    %414 = vsyncpa [#allocation4], 1
    %s415 = scalar_lea.sflag [#allocation4], 1
    %416 = vsyncpa %s415, 1

</llo_original>
